<compile_context>
chip_gen: v7x
topology: tpu7x:2x2x1
jax: 0.10.0
libtpu: 0.0.40
codegen_flags: <defaults>
</compile_context>

<pallas_src>
import jax
import jax.numpy as jnp
from jax.experimental import pallas as pl
from jax.experimental.pallas import tpu as pltpu

IGNORE_INDEX = 255


def _make_partials_kernel(has_pw):
    def kernel(*refs):
        if has_pw:
            x_ref, y_ref, pw_ref, out_ref = refs
        else:
            x_ref, y_ref, out_ref = refs
            pw_ref = None

        # x_ref  : (1, 2, TR, TL) logits (input dtype; upcast per-tile)
        # y_ref  : (1, TR, TL)    integer labels (0 / 1 / anything else = ignored)
        # pw_ref : (1, TR, TL)    per-pixel weights (pw path only)
        # out_ref: (1, 1, 4, 1, TL) f32 resident accumulator [cnt0, cnt1, nll_sum0, nll_sum1]
        @pl.when(pl.program_id(2) == 0)
        def _():
            out_ref[...] = jnp.zeros_like(out_ref)

        x0 = x_ref[0, 0].astype(jnp.float32)
        x1 = x_ref[0, 1].astype(jnp.float32)
        y = y_ref[0]

        m0 = (y == 0).astype(jnp.float32)
        m1 = (y == 1).astype(jnp.float32)

        # softplus-of-difference log-sum-exp (stable): lse-x0 = sp, lse-x1 = sp - d
        d = x1 - x0
        sp = jnp.maximum(d, 0.0) + jnp.log(1.0 + jnp.exp(-jnp.abs(d)))
        nll0 = sp        # -log softmax(x)[class 0]
        nll1 = sp - d    # -log softmax(x)[class 1]

        if has_pw:
            pw = pw_ref[0].astype(jnp.float32)
            nll0 = nll0 * pw
            nll1 = nll1 * pw

        out_ref[0, 0, 0] += jnp.sum(m0, axis=0, keepdims=True)
        out_ref[0, 0, 1] += jnp.sum(m1, axis=0, keepdims=True)
        out_ref[0, 0, 2] += jnp.sum(m0 * nll0, axis=0, keepdims=True)
        out_ref[0, 0, 3] += jnp.sum(m1 * nll1, axis=0, keepdims=True)

    return kernel


def _pick_tile(hw, x_itemsize=4, target_block_bytes=4 * 1024 * 1024):
    """Choose (lane_tile TL, rows, row_tile TR) for the per-image pixel layout (rows, TL)."""
    # Lane tile: largest multiple of 128 (<=1024) dividing hw, else the full hw.
    tl = hw
    for cand in (1024, 512, 256, 128):
        if hw % cand == 0:
            tl = cand
            break
    # TODO(synk): if hw has no multiple-of-128 divisor we fall back to tl=hw (partially masked
    #             lanes); padding hw up to a multiple of 128 would be fully lane-dense.
    rows = hw // tl
    # Row tile: largest multiple-of-32 divisor of rows whose logits block (2 planes/pixel)
    # stays under target_block_bytes; otherwise take all rows of the image in one step.
    target_rows = max(1, target_block_bytes // (tl * 2 * x_itemsize))
    trw = rows
    if rows > target_rows:
        cand = (target_rows // 32) * 32
        while cand >= 32:
            if rows % cand == 0:
                trw = cand
                break
            cand -= 32
        # TODO(synk): pathological rows with no multiple-of-32 divisor fall back to trw=rows.
    return tl, rows, trw


def celoss2_forward(x, y, pixel_weights=None, ignore_index=IGNORE_INDEX):
    """Pallas equivalent of CELoss2.forward. Returns ([loss_scalar], ['loss'])."""
    N, C, H, W = x.shape
    assert C == 2, "CELoss2 is binary-class only"
    assert int(ignore_index) not in (0, 1), "ignore_index must not collide with class labels"

    HW = H * W
    tl, rows, trw = _pick_tile(HW, x_itemsize=x.dtype.itemsize)
    row_tiles = rows // trw
    # Split the reduction into S parallel slices so both v7x TensorCores work even for N == 1.
    S = 2 if (row_tiles >= 2 and row_tiles % 2 == 0) else 1
    T = row_tiles // S

    # Free reshapes only: no transpose, no ones() pixel-weight stream, no label recast pass.
    xk = x.reshape(N, C, rows, tl)
    yk = y.reshape(N, rows, tl)
    if not jnp.issubdtype(yk.dtype, jnp.integer):
        yk = yk.astype(jnp.int32)

    grid = (N, S, T)
    x_spec = pl.BlockSpec((1, C, trw, tl), lambda n, s, t: (n, 0, s * T + t, 0))
    y_spec = pl.BlockSpec((1, trw, tl), lambda n, s, t: (n, s * T + t, 0))
    out_spec = pl.BlockSpec((1, 1, 4, 1, tl), lambda n, s, t: (n, s, 0, 0, 0))
    out_shape = jax.ShapeDtypeStruct((N, S, 4, 1, tl), jnp.float32)
    cparams = pltpu.CompilerParams(
        dimension_semantics=("parallel", "parallel", "arbitrary"),
        vmem_limit_bytes=32 * 1024 * 1024,
    )

    if pixel_weights is None:
        partials = pl.pallas_call(
            _make_partials_kernel(has_pw=False),
            out_shape=out_shape,
            grid_spec=pltpu.PrefetchScalarGridSpec(
                num_scalar_prefetch=0,
                grid=grid,
                in_specs=[x_spec, y_spec],
                out_specs=out_spec,
            ),
            compiler_params=cparams,
        )(xk, yk)
    else:
        pwk = pixel_weights.reshape(N, rows, tl)
        if not jnp.issubdtype(pwk.dtype, jnp.floating):
            pwk = pwk.astype(jnp.float32)
        pw_spec = pl.BlockSpec((1, trw, tl), lambda n, s, t: (n, s * T + t, 0))
        partials = pl.pallas_call(
            _make_partials_kernel(has_pw=True),
            out_shape=out_shape,
            grid_spec=pltpu.PrefetchScalarGridSpec(
                num_scalar_prefetch=0,
                grid=grid,
                in_specs=[x_spec, y_spec, pw_spec],
                out_specs=out_spec,
            ),
            compiler_params=cparams,
        )(xk, yk, pwk)

    cnt0 = jnp.sum(partials[:, :, 0])
    cnt1 = jnp.sum(partials[:, :, 1])
    s0 = jnp.sum(partials[:, :, 2])  # sum of NLL (times pixel_weights) over background pixels
    s1 = jnp.sum(partials[:, :, 3])  # sum of NLL (times pixel_weights) over foreground pixels

    # compute_class_weights: fg_weight = (#y==0)/(#y==1 + eps), clamped to [1, 1e6]
    fg_weight = jnp.clip(cnt0 / (cnt1 + 1e-6), 1.0, 1e6)

    if pixel_weights is None:
        # nn.CrossEntropyLoss(weight=[1, fg_w], ignore_index): weighted mean over valid pixels
        loss = (s0 + fg_weight * s1) / (cnt0 + fg_weight * cnt1)
    else:
        # reduction='none' CE already applies the class weight; reduce_loss applies it again.
        loss = (s0 + fg_weight * fg_weight * s1) / (cnt0 + fg_weight * cnt1)

    return [loss], ["loss"]


# --------------------------- pure-JAX references (sanity checks) ---------------------------

def _reference_forward(x, y):
    """pixel_weights=None path."""
    yl = y[:, 0].astype(jnp.int32)
    cnt0 = jnp.sum(yl == 0).astype(jnp.float32)
    cnt1 = jnp.sum(yl == 1).astype(jnp.float32)
    fg = jnp.clip(cnt0 / (cnt1 + 1e-6), 1.0, 1e6)
    xf = x.astype(jnp.float32)
    lse = jax.scipy.special.logsumexp(xf, axis=1)
    tgt = jnp.clip(yl, 0, 1)
    picked = jnp.take_along_axis(xf, tgt[:, None], axis=1)[:, 0]
    nll = lse - picked
    valid = (yl == 0) | (yl == 1)
    w = jnp.where(yl == 1, fg, 1.0)
    num = jnp.sum(jnp.where(valid, w * nll, 0.0))
    den = jnp.sum(jnp.where(valid, w, 0.0))
    return num / den


def _reference_forward_pw(x, y, pw):
    """pixel_weights path (PyTorch applies the class weight in CE and again in reduce_loss)."""
    yl = y[:, 0].astype(jnp.int32)
    cnt0 = jnp.sum(yl == 0).astype(jnp.float32)
    cnt1 = jnp.sum(yl == 1).astype(jnp.float32)
    fg = jnp.clip(cnt0 / (cnt1 + 1e-6), 1.0, 1e6)
    xf = x.astype(jnp.float32)
    lse = jax.scipy.special.logsumexp(xf, axis=1)
    picked = jnp.take_along_axis(xf, yl[:, None], axis=1)[:, 0]
    nll = lse - picked
    w = jnp.where(yl == 1, fg, 1.0)            # class weight inside reduction='none' CE
    loss_px = w * nll * pw
    num = fg * jnp.sum(jnp.where(yl == 1, loss_px, 0.0)) + jnp.sum(jnp.where(yl == 0, loss_px, 0.0))
    den = cnt1 * fg + cnt0
    return num / den


if __name__ == "__main__":
    key = jax.random.PRNGKey(0)
    kx, ky, kp = jax.random.split(key, 3)

    N, C, H, W = 2, 2, 16, 16
    x = jax.random.normal(kx, (N, C, H, W), dtype=jnp.float32)

    # labels: mostly background (0), some foreground (1), a few ignored (255)
    u = jax.random.uniform(ky, (N, 1, H, W))
    y = jnp.where(u < 0.70, 0, jnp.where(u < 0.95, 1, IGNORE_INDEX)).astype(jnp.int32)

    losses, names = celoss2_forward(x, y)
    loss = jax.block_until_ready(losses[0])
    ref = _reference_forward(x, y)
    assert jnp.allclose(loss, ref, rtol=1e-5, atol=1e-5), (loss, ref)

    # pixel_weights path (PyTorch's pw path has no ignore_index -> use clean {0,1} labels)
    y2 = jnp.where(u < 0.75, 0, 1).astype(jnp.int32)
    pw = jax.random.uniform(kp, (N, H, W), dtype=jnp.float32) + 0.5
    losses2, _ = celoss2_forward(x, y2, pixel_weights=pw)
    loss2 = jax.block_until_ready(losses2[0])
    ref2 = _reference_forward_pw(x, y2, pw)
    assert jnp.allclose(loss2, ref2, rtol=1e-5, atol=1e-5), (loss2, ref2)

    print("KERNEL_OK")
</pallas_src>

<mosaic_0001>
module attributes {stable_mosaic.version = 11 : i64} {
  func.func @kernel(%arg0: i32, %arg1: i32, %arg2: i32, %arg3: memref<1x2x1x256xf32, #tpu.memory_space<vmem>>, %arg4: memref<1x1x256xi32, #tpu.memory_space<vmem>>, %arg5: memref<1x1x4x1x256xf32, #tpu.memory_space<vmem>>) attributes {dimension_semantics = [#tpu.dimension_semantics<parallel>, #tpu.dimension_semantics<parallel>, #tpu.dimension_semantics<arbitrary>], iteration_bounds = array<i64: 2, 1, 1>, scalar_prefetch = 0 : i64, scratch_operands = 0 : i64, tpu.core_type = #tpu.core_type<tc>, window_params = [{transform_indices = @transform_0, window_bounds = array<i64: 1, 2, 1, 256>}, {transform_indices = @transform_1, window_bounds = array<i64: 1, 1, 256>}, {transform_indices = @transform_2, window_bounds = array<i64: 1, 1, 4, 1, 256>}]} {
    %c0_i32 = arith.constant 0 : i32
    %0 = arith.cmpi eq, %arg2, %c0_i32 : i32
    %1 = arith.extui %0 : i1 to i32
    %c0_i32_0 = arith.constant 0 : i32
    %2 = arith.cmpi ne, %1, %c0_i32_0 : i32
    scf.if %2 {
      %cst_55 = arith.constant 0.000000e+00 : f32
      %63 = vector.broadcast %cst_55 : f32 to vector<1x1x4x1x256xf32>
      %c0_56 = arith.constant 0 : index
      %c0_57 = arith.constant 0 : index
      %c0_58 = arith.constant 0 : index
      %c0_59 = arith.constant 0 : index
      %c0_60 = arith.constant 0 : index
      %64 = vector.load %arg5[%c0_56, %c0_57, %c0_58, %c0_59, %c0_60] : memref<1x1x4x1x256xf32, #tpu.memory_space<vmem>>, vector<1x1x4x1x256xf32>
      tpu.vector_store %arg5[%c0_56, %c0_57, %c0_58, %c0_59, %c0_60], %63 {strides = array<i32>} : memref<1x1x4x1x256xf32, #tpu.memory_space<vmem>>, vector<1x1x4x1x256xf32>,
    } else {
    }
    %c0 = arith.constant 0 : index
    %c0_1 = arith.constant 0 : index
    %c0_2 = arith.constant 0 : index
    %c0_3 = arith.constant 0 : index
    %3 = vector.load %arg3[%c0, %c0_1, %c0_2, %c0_3] : memref<1x2x1x256xf32, #tpu.memory_space<vmem>>, vector<1x1x1x256xf32>
    %4 = vector.shape_cast %3 : vector<1x1x1x256xf32> to vector<1x256xf32>
    %c0_4 = arith.constant 0 : index
    %c1 = arith.constant 1 : index
    %c0_5 = arith.constant 0 : index
    %c0_6 = arith.constant 0 : index
    %5 = vector.load %arg3[%c0_4, %c1, %c0_5, %c0_6] : memref<1x2x1x256xf32, #tpu.memory_space<vmem>>, vector<1x1x1x256xf32>
    %6 = vector.shape_cast %5 : vector<1x1x1x256xf32> to vector<1x256xf32>
    %c0_7 = arith.constant 0 : index
    %c0_8 = arith.constant 0 : index
    %c0_9 = arith.constant 0 : index
    %7 = vector.load %arg4[%c0_7, %c0_8, %c0_9] : memref<1x1x256xi32, #tpu.memory_space<vmem>>, vector<1x1x256xi32>
    %8 = vector.shape_cast %7 : vector<1x1x256xi32> to vector<1x256xi32>
    %c0_i32_10 = arith.constant 0 : i32
    %9 = vector.broadcast %c0_i32_10 : i32 to vector<1x256xi32>
    %10 = arith.cmpi eq, %8, %9 : vector<1x256xi32>
    %11 = arith.extui %10 : vector<1x256xi1> to vector<1x256xi32>
    %12 = arith.sitofp %11 : vector<1x256xi32> to vector<1x256xf32>
    %c1_i32 = arith.constant 1 : i32
    %13 = vector.broadcast %c1_i32 : i32 to vector<1x256xi32>
    %14 = arith.cmpi eq, %8, %13 : vector<1x256xi32>
    %15 = arith.extui %14 : vector<1x256xi1> to vector<1x256xi32>
    %16 = arith.sitofp %15 : vector<1x256xi32> to vector<1x256xf32>
    %17 = arith.subf %6, %4 : vector<1x256xf32>
    %cst = arith.constant 0.000000e+00 : f32
    %18 = vector.broadcast %cst : f32 to vector<1x256xf32>
    %19 = arith.maximumf %17, %18 : vector<1x256xf32>
    %20 = math.absf %17 : vector<1x256xf32>
    %cst_11 = arith.constant 0.000000e+00 : f32
    %21 = vector.broadcast %cst_11 : f32 to vector<1x256xf32>
    %22 = arith.subf %21, %20 : vector<1x256xf32>
    %23 = math.exp %22 : vector<1x256xf32>
    %cst_12 = arith.constant 1.000000e+00 : f32
    %24 = vector.broadcast %cst_12 : f32 to vector<1x256xf32>
    %25 = arith.addf %24, %23 : vector<1x256xf32>
    %26 = math.log %25 : vector<1x256xf32>
    %27 = arith.addf %19, %26 : vector<1x256xf32>
    %28 = arith.subf %27, %17 : vector<1x256xf32>
    %c0_13 = arith.constant 0 : index
    %c0_14 = arith.constant 0 : index
    %c0_15 = arith.constant 0 : index
    %c0_16 = arith.constant 0 : index
    %c0_17 = arith.constant 0 : index
    %29 = vector.load %arg5[%c0_13, %c0_14, %c0_15, %c0_16, %c0_17] : memref<1x1x4x1x256xf32, #tpu.memory_space<vmem>>, vector<1x1x1x1x256xf32>
    %30 = vector.shape_cast %29 : vector<1x1x1x1x256xf32> to vector<1x256xf32>
    %cst_18 = arith.constant dense<0.000000e+00> : vector<256xf32>
    %31 = vector.multi_reduction <add>, %12, %cst_18 [0] : vector<1x256xf32> to vector<256xf32>
    %32 = vector.shape_cast %31 : vector<256xf32> to vector<1x256xf32>
    %33 = arith.addf %30, %32 : vector<1x256xf32>
    %c0_19 = arith.constant 0 : index
    %c0_20 = arith.constant 0 : index
    %c0_21 = arith.constant 0 : index
    %c0_22 = arith.constant 0 : index
    %c0_23 = arith.constant 0 : index
    %34 = vector.load %arg5[%c0_19, %c0_20, %c0_21, %c0_22, %c0_23] : memref<1x1x4x1x256xf32, #tpu.memory_space<vmem>>, vector<1x1x1x1x256xf32>
    %35 = vector.shape_cast %34 : vector<1x1x1x1x256xf32> to vector<1x256xf32>
    %36 = vector.shape_cast %33 : vector<1x256xf32> to vector<1x1x1x1x256xf32>
    tpu.vector_store %arg5[%c0_19, %c0_20, %c0_21, %c0_22, %c0_23], %36 {strides = array<i32>} : memref<1x1x4x1x256xf32, #tpu.memory_space<vmem>>, vector<1x1x1x1x256xf32>,
    %c0_24 = arith.constant 0 : index
    %c0_25 = arith.constant 0 : index
    %c1_26 = arith.constant 1 : index
    %c0_27 = arith.constant 0 : index
    %c0_28 = arith.constant 0 : index
    %37 = vector.load %arg5[%c0_24, %c0_25, %c1_26, %c0_27, %c0_28] : memref<1x1x4x1x256xf32, #tpu.memory_space<vmem>>, vector<1x1x1x1x256xf32>
    %38 = vector.shape_cast %37 : vector<1x1x1x1x256xf32> to vector<1x256xf32>
    %cst_29 = arith.constant dense<0.000000e+00> : vector<256xf32>
    %39 = vector.multi_reduction <add>, %16, %cst_29 [0] : vector<1x256xf32> to vector<256xf32>
    %40 = vector.shape_cast %39 : vector<256xf32> to vector<1x256xf32>
    %41 = arith.addf %38, %40 : vector<1x256xf32>
    %c0_30 = arith.constant 0 : index
    %c0_31 = arith.constant 0 : index
    %c1_32 = arith.constant 1 : index
    %c0_33 = arith.constant 0 : index
    %c0_34 = arith.constant 0 : index
    %42 = vector.load %arg5[%c0_30, %c0_31, %c1_32, %c0_33, %c0_34] : memref<1x1x4x1x256xf32, #tpu.memory_space<vmem>>, vector<1x1x1x1x256xf32>
    %43 = vector.shape_cast %42 : vector<1x1x1x1x256xf32> to vector<1x256xf32>
    %44 = vector.shape_cast %41 : vector<1x256xf32> to vector<1x1x1x1x256xf32>
    tpu.vector_store %arg5[%c0_30, %c0_31, %c1_32, %c0_33, %c0_34], %44 {strides = array<i32>} : memref<1x1x4x1x256xf32, #tpu.memory_space<vmem>>, vector<1x1x1x1x256xf32>,
    %c0_35 = arith.constant 0 : index
    %c0_36 = arith.constant 0 : index
    %c2 = arith.constant 2 : index
    %c0_37 = arith.constant 0 : index
    %c0_38 = arith.constant 0 : index
    %45 = vector.load %arg5[%c0_35, %c0_36, %c2, %c0_37, %c0_38] : memref<1x1x4x1x256xf32, #tpu.memory_space<vmem>>, vector<1x1x1x1x256xf32>
    %46 = vector.shape_cast %45 : vector<1x1x1x1x256xf32> to vector<1x256xf32>
    %47 = arith.mulf %12, %27 : vector<1x256xf32>
    %cst_39 = arith.constant dense<0.000000e+00> : vector<256xf32>
    %48 = vector.multi_reduction <add>, %47, %cst_39 [0] : vector<1x256xf32> to vector<256xf32>
    %49 = vector.shape_cast %48 : vector<256xf32> to vector<1x256xf32>
    %50 = arith.addf %46, %49 : vector<1x256xf32>
    %c0_40 = arith.constant 0 : index
    %c0_41 = arith.constant 0 : index
    %c2_42 = arith.constant 2 : index
    %c0_43 = arith.constant 0 : index
    %c0_44 = arith.constant 0 : index
    %51 = vector.load %arg5[%c0_40, %c0_41, %c2_42, %c0_43, %c0_44] : memref<1x1x4x1x256xf32, #tpu.memory_space<vmem>>, vector<1x1x1x1x256xf32>
    %52 = vector.shape_cast %51 : vector<1x1x1x1x256xf32> to vector<1x256xf32>
    %53 = vector.shape_cast %50 : vector<1x256xf32> to vector<1x1x1x1x256xf32>
    tpu.vector_store %arg5[%c0_40, %c0_41, %c2_42, %c0_43, %c0_44], %53 {strides = array<i32>} : memref<1x1x4x1x256xf32, #tpu.memory_space<vmem>>, vector<1x1x1x1x256xf32>,
    %c0_45 = arith.constant 0 : index
    %c0_46 = arith.constant 0 : index
    %c3 = arith.constant 3 : index
    %c0_47 = arith.constant 0 : index
    %c0_48 = arith.constant 0 : index
    %54 = vector.load %arg5[%c0_45, %c0_46, %c3, %c0_47, %c0_48] : memref<1x1x4x1x256xf32, #tpu.memory_space<vmem>>, vector<1x1x1x1x256xf32>
    %55 = vector.shape_cast %54 : vector<1x1x1x1x256xf32> to vector<1x256xf32>
    %56 = arith.mulf %16, %28 : vector<1x256xf32>
    %cst_49 = arith.constant dense<0.000000e+00> : vector<256xf32>
    %57 = vector.multi_reduction <add>, %56, %cst_49 [0] : vector<1x256xf32> to vector<256xf32>
    %58 = vector.shape_cast %57 : vector<256xf32> to vector<1x256xf32>
    %59 = arith.addf %55, %58 : vector<1x256xf32>
    %c0_50 = arith.constant 0 : index
    %c0_51 = arith.constant 0 : index
    %c3_52 = arith.constant 3 : index
    %c0_53 = arith.constant 0 : index
    %c0_54 = arith.constant 0 : index
    %60 = vector.load %arg5[%c0_50, %c0_51, %c3_52, %c0_53, %c0_54] : memref<1x1x4x1x256xf32, #tpu.memory_space<vmem>>, vector<1x1x1x1x256xf32>
    %61 = vector.shape_cast %60 : vector<1x1x1x1x256xf32> to vector<1x256xf32>
    %62 = vector.shape_cast %59 : vector<1x256xf32> to vector<1x1x1x1x256xf32>
    tpu.vector_store %arg5[%c0_50, %c0_51, %c3_52, %c0_53, %c0_54], %62 {strides = array<i32>} : memref<1x1x4x1x256xf32, #tpu.memory_space<vmem>>, vector<1x1x1x1x256xf32>,
    return
  }
  func.func @transform_0(%arg0: i32, %arg1: i32, %arg2: i32) -> (i32, i32, i32, i32) {
    %c1_i32 = arith.constant 1 : i32
    %0 = arith.muli %arg1, %c1_i32 : i32
    %1 = arith.addi %0, %arg2 : i32
    %c0_i32 = arith.constant 0 : i32
    %c0_i32_0 = arith.constant 0 : i32
    %c0_i32_1 = arith.constant 0 : i32
    return %arg0, %c0_i32, %1, %c0_i32_0 : i32, i32, i32, i32
  }
  func.func @transform_1(%arg0: i32, %arg1: i32, %arg2: i32) -> (i32, i32, i32) {
    %c1_i32 = arith.constant 1 : i32
    %0 = arith.muli %arg1, %c1_i32 : i32
    %1 = arith.addi %0, %arg2 : i32
    %c0_i32 = arith.constant 0 : i32
    %c0_i32_0 = arith.constant 0 : i32
    return %arg0, %1, %c0_i32 : i32, i32, i32
  }
  func.func @transform_2(%arg0: i32, %arg1: i32, %arg2: i32) -> (i32, i32, i32, i32, i32) {
    %c0_i32 = arith.constant 0 : i32
    %c0_i32_0 = arith.constant 0 : i32
    %c0_i32_1 = arith.constant 0 : i32
    %c0_i32_2 = arith.constant 0 : i32
    return %arg0, %arg1, %c0_i32, %c0_i32_0, %c0_i32_1 : i32, i32, i32, i32, i32
  }
}

</mosaic_0001>

<llo_original>
// kernel: tpu_custom_call.1
$region0: #{tpu_custom_call.1}
  #allocation0 [shape = 'u32[]', space=smem, size = 0x4, offset = 0x4, fixed_abs, tag = 'smem constant byte address 0x4 - core index']
  #allocation1 [shape = 'u32[144,128]{1,0:T(1,128)}', space=vmem, size = 0x12000, scoped, tag = 'internal scratch']
  %s0 = inlined_call_operand.hbm [shape: f32[2,2,1,256], index: 0, kind: input, shape index: {}]
  %s1 = inlined_call_operand.hbm [shape: s32[2,1,256], index: 1, kind: input, shape index: {}]
  %s2 = inlined_call_operand.hbm [shape: f32[2,1,4,1,256], index: 2, kind: output, shape index: {}]
  %s3 = sld [smem:[#allocation0]]
  $region53: #{tpu_custom_call.1} parent=0
    _
  %s5 = ssub.s32 1, %s3
  %s6 = scalar_select 0, %s5, %s3
  $region1: #{tpu_custom_call.1} parent=0
    #allocation2 [shape = 'u8[4096]{0}', space=vmem, size = 0x1000, scoped, tag = 'input window, operand 0']
    #allocation3 [shape = 's32[2]{0}', space=sflag, size = 0x8, scoped, tag = 'scoped memory for tpu_custom_call.1']
    #allocation4 [shape = 's32[2]{0}', space=sflag, size = 0x8, scoped, tag = 'scoped memory for tpu_custom_call.1']
    #allocation5 [shape = 'u8[2048]{0}', space=vmem, size = 0x800, scoped, tag = 'input window, operand 1']
    #allocation6 [shape = 's32[2]{0}', space=sflag, size = 0x8, scoped, tag = 'scoped memory for tpu_custom_call.1']
    #allocation7 [shape = 'u8[8192]{0}', space=vmem, size = 0x2000, scoped, tag = 'output window, operand 0']
    %7 = vsyncpa [#allocation3], 0
    %s8 = scalar_lea.sflag [#allocation3], 1
    %9 = vsyncpa %s8, 0
    %10 = vsyncpa [#allocation6], 0
    %s11 = scalar_lea.sflag [#allocation6], 1
    %12 = vsyncpa %s11, 0
    %13 = vsyncpa [#allocation4], 0
    %s14 = scalar_lea.sflag [#allocation4], 1
    %15 = vsyncpa %s14, 0
    loop: start=0, step=1, limit=4
    $region2: #{tpu_custom_call.1} parent=1 // loop_pre_header
      _
    $region3: #{tpu_custom_call.1} parent=1 // loop_header
      %s17 = sphi 0, %s21
      %p18 = scmp.ge.s32.totalorder %s17, 4
      %s24 = sphi 0, %s43
      %s25 = sphi 0, %s39
      %s26 = sphi 0, %s35
      %s27 = sphi 0, %s24
      %s28 = sphi 0, %s25
      %s29 = sphi 0, %s26
      %s30 = sphi 0, %s27
      %s31 = sphi 0, %s28
      %s32 = sphi 0, %s29
      %s50 = sphi 0, %s52
      %s53 = sphi 0, %s50
      %s54 = sphi 0, %s53
      %s70 = sphi 0, %s54
      %s80 = sphi 0, %s82
      %s83 = sphi 0, %s80
      %s84 = sphi 0, %s83
      %s100 = sphi 0, %s84
      %s108 = sphi 0, %s110
      %s111 = sphi 0, %s108
      %s112 = sphi 0, %s111
      %s128 = sphi 0, %s112
    $region4: #{tpu_custom_call.1} parent=1 // loop_header_branch
      %20 = sbr.rel (%p18) target = $region8
    $region5: #{tpu_custom_call.1} parent=1 // loop_body
      %s22 = ssub.s32 %s17, 1
      %s23 = ssub.s32 %s17, 2
      %s33 = sadd.s32 1, %s26
      %p34 = scmp.ge.s32.totalorder %s33, 1
      %s35 = scalar_select %p34, 0, %s33
      %s36 = sadd.s32 1, %s25
      %s37 = scalar_select %p34, %s36, %s25
      %p38 = scmp.ge.s32.totalorder %s37, 1
      %s39 = scalar_select %p38, 0, %s37
      %s40 = sadd.s32 1, %s24
      %s41 = scalar_select %p38, %s40, %s24
      %p42 = scmp.ge.s32.totalorder %s41, 2
      %s43 = scalar_select %p42, 0, %s41
      %s44 = sadd.s32 %s25, %s26
      %s45 = sadd.s32 %s39, %s35
      %s46 = ssub.s32 %s24, %s43
      %s47 = ssub.s32 %s44, %s45
      %s48 = sor.u32 %s46, %s47
      %p49 = scmp.eq.s32.totalorder %s48, 0
      %s51 = sadd.s32 %s50, 1
      %s52 = scalar_select %p49, %s50, %s51
      %p55 = pneg %p49
      %p56 = scmp.eq.s32.totalorder %s17, 1
      %p57 = por %p55, %p56
      %p58 = scmp.ne.s32.totalorder %s50, %s53
      %p59 = scmp.eq.s32.totalorder %s17, 0
      %p60 = por %p58, %p59
      %p61 = scmp.ne.s32.totalorder %s50, %s53
      %p62 = scmp.eq.s32.totalorder %s22, 1
      %p63 = por %p61, %p62
      %p64 = scmp.ne.s32.totalorder %s53, %s54
      %p65 = scmp.eq.s32.totalorder %s22, 0
      %p66 = por %p64, %p65
      %p67 = scmp.ne.s32.totalorder %s53, %s54
      %p68 = scmp.eq.s32.totalorder %s23, 1
      %p69 = por %p67, %p68
      %p71 = scmp.ne.s32.totalorder %s54, %s70
      %p72 = scmp.eq.s32.totalorder %s23, 0
      %p73 = por %p71, %p72
      %s74 = sadd.s32 %s25, %s26
      %s75 = sadd.s32 %s39, %s35
      %s76 = ssub.s32 %s24, %s43
      %s77 = ssub.s32 %s74, %s75
      %s78 = sor.u32 %s76, %s77
      %p79 = scmp.eq.s32.totalorder %s78, 0
      %s81 = sadd.s32 %s80, 1
      %s82 = scalar_select %p79, %s80, %s81
      %p85 = pneg %p79
      %p86 = scmp.eq.s32.totalorder %s17, 1
      %p87 = por %p85, %p86
      %p88 = scmp.ne.s32.totalorder %s80, %s83
      %p89 = scmp.eq.s32.totalorder %s17, 0
      %p90 = por %p88, %p89
      %p91 = scmp.ne.s32.totalorder %s80, %s83
      %p92 = scmp.eq.s32.totalorder %s22, 1
      %p93 = por %p91, %p92
      %p94 = scmp.ne.s32.totalorder %s83, %s84
      %p95 = scmp.eq.s32.totalorder %s22, 0
      %p96 = por %p94, %p95
      %p97 = scmp.ne.s32.totalorder %s83, %s84
      %p98 = scmp.eq.s32.totalorder %s23, 1
      %p99 = por %p97, %p98
      %p101 = scmp.ne.s32.totalorder %s84, %s100
      %p102 = scmp.eq.s32.totalorder %s23, 0
      %p103 = por %p101, %p102
      %s104 = ssub.s32 %s24, %s43
      %s105 = ssub.s32 %s25, %s39
      %s106 = sor.u32 %s104, %s105
      %p107 = scmp.eq.s32.totalorder %s106, 0
      %s109 = sadd.s32 %s108, 1
      %s110 = scalar_select %p107, %s108, %s109
      %p113 = pneg %p107
      %p114 = scmp.eq.s32.totalorder %s17, 1
      %p115 = por %p113, %p114
      %p116 = scmp.ne.s32.totalorder %s108, %s111
      %p117 = scmp.eq.s32.totalorder %s17, 0
      %p118 = por %p116, %p117
      %p119 = scmp.ne.s32.totalorder %s108, %s111
      %p120 = scmp.eq.s32.totalorder %s22, 1
      %p121 = por %p119, %p120
      %p122 = scmp.ne.s32.totalorder %s111, %s112
      %p123 = scmp.eq.s32.totalorder %s22, 0
      %p124 = por %p122, %p123
      %p125 = scmp.ne.s32.totalorder %s111, %s112
      %p126 = scmp.eq.s32.totalorder %s23, 1
      %p127 = por %p125, %p126
      %p129 = scmp.ne.s32.totalorder %s112, %s128
      %p130 = scmp.eq.s32.totalorder %s23, 0
      %p131 = por %p129, %p130
      %p132 = scmp.le.s32.totalorder 1, %s17
      %p133 = scmp.lt.s32.totalorder %s17, 3
      %p134 = pnand %p132, %p133
      %p135 = pneg %p134
      // Predicated region
      $region9: #{tpu_custom_call.1} parent=5 // pred_check
        _
      $region10: #{tpu_custom_call.1} parent=5 // pred_check_branch
        %137 = sbr.rel (%p134) target = $region12
      $region11: #{tpu_custom_call.1} parent=5 // pred_region
        %s138 = ssub.s32 %s17, 1
      $region12: #{tpu_custom_call.1} parent=5 // pred_fallthru
        _
      %p139 = scmp.lt.s32.totalorder %s17, 2
      // Predicated region
      $region13: #{tpu_custom_call.1} parent=5 // pred_check
        %p140 = pneg %p139
      $region14: #{tpu_custom_call.1} parent=5 // pred_check_branch
        %142 = sbr.rel (%p140) target = $region16
      $region15: #{tpu_custom_call.1} parent=5 // pred_region
        // Predicated region
        $region17: #{tpu_custom_call.1} parent=15 // pred_check
          %p143 = pneg %p60
        $region18: #{tpu_custom_call.1} parent=15 // pred_check_branch
          %145 = sbr.rel (%p143) target = $region20
        $region19: #{tpu_custom_call.1} parent=15 // pred_region
          %s146 = sand.u32 %s50, 1
          %s147 = scalar_lea.sflag [#allocation3], %s146
          %s148 = sand.u32 %s50, 1
          %s149 = smul.addr %s148, 4
          %s150 = scalar_lea.vmem [#allocation2], %s149
          %s151 = sadd.s32 %s25, %s26
          %s153 = ssub.s32 64, 64
          %154 = vsyncadd %s147, %s153
          %s155 = smul.addr %s151, 2
          %s156 = smul.addr %s24, 4
          %s157 = sadd.s32 %s155, %s156
          %s158 = smul.addr %s157, 16
          %s159 = scalar_lea.hbm %s0, %s158
          %s160 = sshll.u32 %s150, 4
          %s161 = int_to_ptr.vmem [resolvable:$true] %s160
          %166 = dma.hbm_to_vmem [thread:$0]  %s159, 64, %s161, %s147, 32, 32, 2
        $region20: #{tpu_custom_call.1} parent=15 // pred_fallthru
          _
        // Predicated region
        $region21: #{tpu_custom_call.1} parent=15 // pred_check
          %p167 = pneg %p90
        $region22: #{tpu_custom_call.1} parent=15 // pred_check_branch
          %169 = sbr.rel (%p167) target = $region24
        $region23: #{tpu_custom_call.1} parent=15 // pred_region
          %s170 = sand.u32 %s80, 1
          %s171 = scalar_lea.sflag [#allocation6], %s170
          %s172 = sand.u32 %s80, 1
          %s173 = smul.addr %s172, 2
          %s174 = scalar_lea.vmem [#allocation5], %s173
          %s175 = sadd.s32 %s25, %s26
          %s177 = ssub.s32 32, 32
          %178 = vsyncadd %s171, %s177
          %s179 = smul.addr %s175, 2
          %s180 = smul.addr %s24, 2
          %s181 = sadd.s32 %s179, %s180
          %s182 = smul.addr %s181, 16
          %s183 = scalar_lea.hbm %s1, %s182
          %s185 = sshll.u32 %s174, 4
          %s186 = int_to_ptr.vmem [resolvable:$true] %s185
          %188 = dma.hbm_to_vmem [thread:$0]  %s183, 32, %s186, %s171
        $region24: #{tpu_custom_call.1} parent=15 // pred_fallthru
          _
      $region16: #{tpu_custom_call.1} parent=5 // pred_fallthru
        _
      %p189 = scmp.le.s32.totalorder 1, %s17
      %p190 = scmp.lt.s32.totalorder %s17, 3
      %p191 = pnand %p189, %p190
      %p192 = pneg %p191
      // Predicated region
      $region25: #{tpu_custom_call.1} parent=5 // pred_check
        _
      $region26: #{tpu_custom_call.1} parent=5 // pred_check_branch
        %194 = sbr.rel (%p191) target = $region28
      $region27: #{tpu_custom_call.1} parent=5 // pred_region
        %s195 = ssub.s32 %s17, 1
        %s196 = sand.u32 %s53, 1
        %s197 = scalar_lea.sflag [#allocation3], %s196
        %s198 = sand.u32 %s53, 1
        %s199 = smul.addr %s198, 4
        %s200 = scalar_lea.vmem [#allocation2], %s199
        // Predicated region
        $region29: #{tpu_custom_call.1} parent=27 // pred_check
          %p201 = pneg %p66
        $region30: #{tpu_custom_call.1} parent=27 // pred_check_branch
          %203 = sbr.rel (%p201) target = $region32
        $region31: #{tpu_custom_call.1} parent=27 // pred_region
          %204 = dma.done %s197, 64
        $region32: #{tpu_custom_call.1} parent=27 // pred_fallthru
          _
        %s205 = sand.u32 %s83, 1
        %s206 = scalar_lea.sflag [#allocation6], %s205
        %s207 = sand.u32 %s83, 1
        %s208 = smul.addr %s207, 2
        %s209 = scalar_lea.vmem [#allocation5], %s208
        // Predicated region
        $region33: #{tpu_custom_call.1} parent=27 // pred_check
          %p210 = pneg %p96
        $region34: #{tpu_custom_call.1} parent=27 // pred_check_branch
          %212 = sbr.rel (%p210) target = $region36
        $region35: #{tpu_custom_call.1} parent=27 // pred_region
          %213 = dma.done %s206, 32
        $region36: #{tpu_custom_call.1} parent=27 // pred_fallthru
          _
        %s214 = sand.u32 %s53, 1
        %s215 = scalar_lea.sflag [#allocation3], %s214
        %s216 = sand.u32 %s53, 1
        %s217 = smul.addr %s216, 4
        %s218 = scalar_lea.vmem [#allocation2], %s217
        %p219 = pneg %p66
        %p220 = pneg %p63
        %s221 = sand.u32 %s83, 1
        %s222 = scalar_lea.sflag [#allocation6], %s221
        %s223 = sand.u32 %s83, 1
        %s224 = smul.addr %s223, 2
        %s225 = scalar_lea.vmem [#allocation5], %s224
        %p226 = pneg %p96
        %p227 = pneg %p93
        %p228 = pneg %p124
        %p229 = pneg %p121
        %s230 = sand.u32 %s111, 1
        %s231 = scalar_lea.sflag [#allocation4], %s230
        %s232 = sand.u32 %s111, 1
        %s233 = smul.addr %s232, 8
        %s234 = scalar_lea.vmem [#allocation7], %s233
        %s235 = sadd.s32 %s28, %s29
        %s236 = sadd.s32 %s28, %s29
        %p237 = scmp.eq.s32.totalorder %s29, 0
        // Predicated region
        $region37: #{tpu_custom_call.1} parent=27 // pred_check
          %p238 = pneg %p237
        $region38: #{tpu_custom_call.1} parent=27 // pred_check_branch
          %240 = sbr.rel (%p238) target = $region40
        $region39: #{tpu_custom_call.1} parent=27 // pred_region
          %v241 = vlaneseq
          %vm242 = vcmp.ge.s32.totalorder %v241, 0
          %vm243 = vcmp.lt.s32.totalorder %v241, 256
          %vm244 = vmand %vm242, %vm243
          %245 = vst.msk [vmem:[%s234] sm:$0x3] %vm244, 0.0
          %246 = vst.msk [vmem:[%s234 + $0x2] sm:$0x3] %vm244, 0.0
          %247 = vst.msk [vmem:[%s234 + $0x4] sm:$0x3] %vm244, 0.0
          %248 = vst.msk [vmem:[%s234 + $0x6] sm:$0x3] %vm244, 0.0
        $region40: #{tpu_custom_call.1} parent=27 // pred_fallthru
          _
        %v249 = vld [vmem:[%s200] sm:$0x3]
        %s250 = scalar_lea.vmem %s200, 2 [#allocation2]
        %v251 = vld [vmem:[%s250] sm:$0x3]
        %v252 = vld [vmem:[%s209] sm:$0x3]
        %vm253 = vcmp.eq.s32.totalorder %v252, 0
        %v254 = vsel %vm253, 1, 0
        %v255 = vcvt.s32.f32 %v254
        %vm256 = vcmp.eq.s32.totalorder %v252, 1
        %v257 = vsel %vm256, 1, 0
        %v258 = vcvt.s32.f32 %v257
        %v259 = vsub.f32 %v251, %v249
        %v260 = vmax.f32 %v259, 0.0
        %v261 = vand.u32 2147483647, %v259
        %v262 = vsub.f32 0.0, %v261
        %v263 = vmul.f32 %v262, 1.442695
        %v264 = vpow.pop %v263
        %v265 = vadd.f32 %v264, 1.0
        %v266 = vlog2.pop %v265
        %v267 = vmul.f32 %v266, 0.6931472
        %v268 = vadd.f32 %v260, %v267
        %v269 = vsub.f32 %v268, %v259
        %v270 = vld [vmem:[%s234] sm:$0x3]
        %v271 = vadd.f32 %v255, 0.0
        %v272 = vadd.f32 %v270, %v271
        %v273 = vlaneseq
        %vm274 = vcmp.ge.s32.totalorder %v273, 0
        %vm275 = vcmp.lt.s32.totalorder %v273, 256
        %vm276 = vmand %vm274, %vm275
        %277 = vst.msk [vmem:[%s234] sm:$0x3] %vm276, %v272
        %s278 = scalar_lea.vmem %s234, 2 [#allocation7]
        %v279 = vld [vmem:[%s278] sm:$0x3]
        %v280 = vadd.f32 %v258, 0.0
        %v281 = vadd.f32 %v279, %v280
        %282 = vst.msk [vmem:[%s278] sm:$0x3] %vm276, %v281
        %s283 = scalar_lea.vmem %s234, 4 [#allocation7]
        %v284 = vld [vmem:[%s283] sm:$0x3]
        %v285 = vmul.f32 %v255, %v268
        %v286 = vadd.f32 %v285, 0.0
        %v287 = vadd.f32 %v284, %v286
        %288 = vst.msk [vmem:[%s283] sm:$0x3] %vm276, %v287
        %s289 = scalar_lea.vmem %s234, 6 [#allocation7]
        %v290 = vld [vmem:[%s289] sm:$0x3]
        %v291 = vmul.f32 %v258, %v269
        %v292 = vadd.f32 %v291, 0.0
        %v293 = vadd.f32 %v290, %v292
        %294 = vst.msk [vmem:[%s289] sm:$0x3] %vm276, %v293
        %s295 = sand.u32 %s111, 1
        %s296 = scalar_lea.sflag [#allocation4], %s295
        %s297 = sand.u32 %s111, 1
        %s298 = smul.addr %s297, 8
        %s299 = scalar_lea.vmem [#allocation7], %s298
        // Predicated region
        $region41: #{tpu_custom_call.1} parent=27 // pred_check
          %p300 = pneg %p121
        $region42: #{tpu_custom_call.1} parent=27 // pred_check_branch
          %302 = sbr.rel (%p300) target = $region44
        $region43: #{tpu_custom_call.1} parent=27 // pred_region
          %s304 = ssub.s32 128, 128
          %305 = vsyncadd %s296, %s304
          %s306 = smul.addr %s28, 8
          %s307 = smul.addr %s27, 8
          %s308 = sadd.s32 %s306, %s307
          %s309 = smul.addr %s308, 16
          %s310 = scalar_lea.hbm %s2, %s309
          %s311 = sshll.u32 %s299, 4
          %s312 = int_to_ptr.vmem [resolvable:$true] %s311
          %317 = dma.vmem_to_hbm [thread:$0]  %s312, 128, %s310, %s296, 32, 32, 2
        $region44: #{tpu_custom_call.1} parent=27 // pred_fallthru
          _
      $region28: #{tpu_custom_call.1} parent=5 // pred_fallthru
        _
      %p318 = scmp.le.s32.totalorder 2, %s17
      // Predicated region
      $region45: #{tpu_custom_call.1} parent=5 // pred_check
        %p319 = pneg %p318
      $region46: #{tpu_custom_call.1} parent=5 // pred_check_branch
        %321 = sbr.rel (%p319) target = $region48
      $region47: #{tpu_custom_call.1} parent=5 // pred_region
        %s322 = ssub.s32 %s17, 2
        // Predicated region
        $region49: #{tpu_custom_call.1} parent=47 // pred_check
          %p323 = pneg %p127
        $region50: #{tpu_custom_call.1} parent=47 // pred_check_branch
          %325 = sbr.rel (%p323) target = $region52
        $region51: #{tpu_custom_call.1} parent=47 // pred_region
          %s326 = sand.u32 %s112, 1
          %s327 = scalar_lea.sflag [#allocation4], %s326
          %s328 = sand.u32 %s112, 1
          %s329 = smul.addr %s328, 8
          %s330 = scalar_lea.vmem [#allocation7], %s329
          %331 = dma.done %s327, 128
        $region52: #{tpu_custom_call.1} parent=47 // pred_fallthru
          _
      $region48: #{tpu_custom_call.1} parent=5 // pred_fallthru
        _
    $region6: #{tpu_custom_call.1} parent=1 // loop_footer
      %s21 = sadd.s32 1, %s17
    $region7: #{tpu_custom_call.1} parent=1 // loop_footer_branch
      %16 = sbr.rel target = $region3
    $region8: #{tpu_custom_call.1} parent=1 // loop_exit
      _
    %332 = vsyncpa [#allocation3], 1
    %s333 = scalar_lea.sflag [#allocation3], 1
    %334 = vsyncpa %s333, 1
    %335 = vsyncpa [#allocation6], 1
    %s336 = scalar_lea.sflag [#allocation6], 1
    %337 = vsyncpa %s336, 1
    %338 = vsyncpa [#allocation4], 1
    %s339 = scalar_lea.sflag [#allocation4], 1
    %340 = vsyncpa %s339, 1

</llo_original>
